<compile_context>
chip_gen: v7x
topology: tpu7x:2x2x1
jax: 0.10.0
libtpu: 0.0.40
codegen_flags: <defaults>
</compile_context>

<pallas_src>
import jax
import jax.numpy as jnp
from jax.experimental import pallas as pl
from jax.experimental.pallas import tpu as pltpu


def _add_pos_kernel(x_ref, pos_ref, o_ref):
    # x_ref:   (TB, L*D) block of flattened inputs (batch rows)
    # pos_ref: (1,  L*D) flattened positional row (grid-invariant)
    # o_ref:   (TB, L*D)
    o_ref[...] = x_ref[...] + pos_ref[...]


def _choose_row_tile(n_rows, row_bytes, target_bytes):
    """Pick a batch-row tile that is either the full extent or a multiple of 8."""
    tb = max(1, target_bytes // max(1, row_bytes))
    if tb >= n_rows:
        return n_rows                       # single full-extent block (always legal)
    tb = (tb // 8) * 8                      # keep (8, 128) block divisibility
    if tb < 8:
        tb = 8
    if tb >= n_rows:
        return n_rows
    return tb


def learnable_pos_embedding(x, pos_table, *, target_block_bytes=2 << 20):
    """x: (B, L, D); pos_table: (max_len, D), L <= max_len."""
    B, L, D = x.shape
    LD = L * D

    # pos_embed(arange(L)) == first L rows; flatten to one lane-dense row.
    # (Tiny: <= max_len*D elements; the reshape of x is a free bitcast.)
    pos = pos_table[:L, :].reshape(1, LD).astype(x.dtype)
    x2 = x.reshape(B, LD)

    tb = _choose_row_tile(B, LD * jnp.dtype(x.dtype).itemsize, target_block_bytes)
    grid = (pl.cdiv(B, tb),)

    out = pl.pallas_call(
        _add_pos_kernel,
        out_shape=jax.ShapeDtypeStruct((B, LD), x.dtype),
        grid_spec=pltpu.PrefetchScalarGridSpec(
            num_scalar_prefetch=0,
            grid=grid,
            in_specs=[
                pl.BlockSpec((tb, LD), lambda i: (i, 0)),   # x rows
                pl.BlockSpec((1, LD), lambda i: (0, 0)),    # pos (grid-invariant)
            ],
            out_specs=pl.BlockSpec((tb, LD), lambda i: (i, 0)),
        ),
        compiler_params=pltpu.CompilerParams(
            dimension_semantics=("parallel",),
        ),
    )(x2, pos)

    return out.reshape(B, L, D)


if __name__ == "__main__":
    # Module config (matches the PyTorch defaults).
    d_model = 32
    max_len = 31

    key = jax.random.PRNGKey(0)
    k_x, k_w, k_x2 = jax.random.split(key, 3)

    # nn.init.uniform_(weight) -> U(0, 1)
    pos_weight = jax.random.uniform(
        k_w, (max_len, d_model), dtype=jnp.float32, minval=0.0, maxval=1.0
    )

    # --- Test 1: small canonical shapes (B=2, L=8, D=32) -> single block. ---
    B, L = 2, 8
    x = jax.random.normal(k_x, (B, L, d_model), dtype=jnp.float32)
    out = learnable_pos_embedding(x, pos_weight)
    out = jax.block_until_ready(out)
    ref = x + pos_weight[:L, :][None, :, :]
    assert out.shape == (B, L, d_model)
    assert jnp.allclose(out, ref, atol=1e-6), "mismatch vs reference (test 1)"

    # --- Test 2: force multi-tile grid with a ragged tail block. -------------
    B2, L2 = 20, 16
    x2 = jax.random.normal(k_x2, (B2, L2, d_model), dtype=jnp.float32)
    # Tiny block target -> TB=8 rows, grid=3, last block ragged (masked writes).
    out2 = learnable_pos_embedding(
        x2, pos_weight, target_block_bytes=8 * L2 * d_model * 4
    )
    out2 = jax.block_until_ready(out2)
    ref2 = x2 + pos_weight[:L2, :][None, :, :]
    assert out2.shape == (B2, L2, d_model)
    assert jnp.allclose(out2, ref2, atol=1e-6), "mismatch vs reference (test 2)"

    print("KERNEL_OK")
</pallas_src>

<mosaic_0001>
module attributes {stable_mosaic.version = 11 : i64} {
  func.func @_add_pos_kernel(%arg0: i32, %arg1: memref<2x256xf32, #tpu.memory_space<vmem>>, %arg2: memref<1x256xf32, #tpu.memory_space<vmem>>, %arg3: memref<2x256xf32, #tpu.memory_space<vmem>>) attributes {dimension_semantics = [#tpu.dimension_semantics<parallel>], iteration_bounds = array<i64: 1>, scalar_prefetch = 0 : i64, scratch_operands = 0 : i64, tpu.core_type = #tpu.core_type<tc>, window_params = [{transform_indices = @transform_0, window_bounds = array<i64: 2, 256>}, {pipeline_mode = #tpu.pipeline_mode<synchronous>, transform_indices = @transform_1, window_bounds = array<i64: 1, 256>}, {transform_indices = @transform_2, window_bounds = array<i64: 2, 256>}]} {
    %c0 = arith.constant 0 : index
    %c0_0 = arith.constant 0 : index
    %0 = vector.load %arg1[%c0, %c0_0] : memref<2x256xf32, #tpu.memory_space<vmem>>, vector<2x256xf32>
    %c0_1 = arith.constant 0 : index
    %c0_2 = arith.constant 0 : index
    %1 = vector.load %arg2[%c0_1, %c0_2] : memref<1x256xf32, #tpu.memory_space<vmem>>, vector<1x256xf32>
    %2 = vector.broadcast %1 : vector<1x256xf32> to vector<2x256xf32>
    %3 = arith.addf %0, %2 : vector<2x256xf32>
    %c0_3 = arith.constant 0 : index
    %c0_4 = arith.constant 0 : index
    %4 = vector.load %arg3[%c0_3, %c0_4] : memref<2x256xf32, #tpu.memory_space<vmem>>, vector<2x256xf32>
    tpu.vector_store %arg3[%c0_3, %c0_4], %3 {strides = array<i32>} : memref<2x256xf32, #tpu.memory_space<vmem>>, vector<2x256xf32>,
    return
  }
  func.func @transform_0(%arg0: i32) -> (i32, i32) {
    %c0_i32 = arith.constant 0 : i32
    %c0_i32_0 = arith.constant 0 : i32
    return %arg0, %c0_i32 : i32, i32
  }
  func.func @transform_1(%arg0: i32) -> (i32, i32) {
    %c0_i32 = arith.constant 0 : i32
    %c0_i32_0 = arith.constant 0 : i32
    %c0_i32_1 = arith.constant 0 : i32
    return %c0_i32, %c0_i32_0 : i32, i32
  }
  func.func @transform_2(%arg0: i32) -> (i32, i32) {
    %c0_i32 = arith.constant 0 : i32
    %c0_i32_0 = arith.constant 0 : i32
    return %arg0, %c0_i32 : i32, i32
  }
}

</mosaic_0001>

<llo_original>
// kernel: tpu_custom_call.1
$region0: #{tpu_custom_call.1}
  #allocation0 [shape = 'u32[]', space=smem, size = 0x4, offset = 0x4, fixed_abs, tag = 'smem constant byte address 0x4 - core index']
  #allocation1 [shape = 'u32[144,128]{1,0:T(1,128)}', space=vmem, size = 0x12000, scoped, tag = 'internal scratch']
  %s0 = inlined_call_operand.hbm [shape: f32[2,256], index: 0, kind: input, shape index: {}]
  %s1 = inlined_call_operand.vmem [shape: f32[1,256], index: 1, kind: input, shape index: {}]
  %s2 = inlined_call_operand.hbm [shape: f32[2,256], index: 2, kind: output, shape index: {}]
  %s3 = sld [smem:[#allocation0]]
  $region22: #{tpu_custom_call.1} parent=0
    _
  %s5 = ssub.s32 1, %s3
  %s6 = scalar_select 0, %s5, %s3
  $region1: #{tpu_custom_call.1} parent=0
    #allocation2 [shape = 'u8[2048]{0}', space=vmem, size = 0x800, scoped, tag = 'input window, operand 0, single buffered']
    #allocation3 [shape = 's32[1]{0}', space=sflag, size = 0x4, scoped, tag = 'scoped memory for tpu_custom_call.1']
    #allocation4 [shape = 's32[1]{0}', space=sflag, size = 0x4, scoped, tag = 'scoped memory for tpu_custom_call.1']
    #allocation5 [shape = 'u8[2048]{0}', space=vmem, size = 0x800, scoped, tag = 'output window, operand 0, single buffered']
    %7 = vsyncpa [#allocation3], 0
    %8 = vsyncpa [#allocation4], 0
    // Predicated region
    $region2: #{tpu_custom_call.1} parent=1 // pred_check
      _
    $region3: #{tpu_custom_call.1} parent=1 // pred_check_branch
      %10 = sbr.rel (0) target = $region5
    $region4: #{tpu_custom_call.1} parent=1 // pred_region
      %s12 = ssub.s32 64, 64
      %13 = vsyncadd [#allocation3], %s12
      %s15 = sshll.u32 [#allocation2], 4
      %s16 = int_to_ptr.vmem [resolvable:$true] %s15
      %18 = dma.hbm_to_vmem [thread:$0]  %s0, 64, %s16, [#allocation3]
    $region5: #{tpu_custom_call.1} parent=1 // pred_fallthru
      _
    // Predicated region
    $region6: #{tpu_custom_call.1} parent=1 // pred_check
      _
    $region7: #{tpu_custom_call.1} parent=1 // pred_check_branch
      %20 = sbr.rel (0) target = $region9
    $region8: #{tpu_custom_call.1} parent=1 // pred_region
      _
    $region9: #{tpu_custom_call.1} parent=1 // pred_fallthru
      _
    // Predicated region
    $region10: #{tpu_custom_call.1} parent=1 // pred_check
      _
    $region11: #{tpu_custom_call.1} parent=1 // pred_check_branch
      %22 = sbr.rel (0) target = $region13
    $region12: #{tpu_custom_call.1} parent=1 // pred_region
      %23 = dma.done [#allocation3], 64
    $region13: #{tpu_custom_call.1} parent=1 // pred_fallthru
      _
    %v24 = vld [vmem:[#allocation2] sm:$0xf]
    %v25 = vld [vmem:[%s1] sm:$0x3]
    %v27 = vlaneseq
    %v28 = vshrl.u32 %v27, 7
    %v29 = vsub.s32 0, %v28
    %v30 = vrot.slane %v25, %v29
    %v31 = vlaneseq
    %v32 = vshrl.u32 %v31, 7
    %v33 = vsub.s32 1, %v32
    %v34 = vrot.slane %v25, %v33
    %v35 = vcombine.low %v30, %v34
    %v37 = vunpack.c.l.s4 1983009808
    %v38 = vunpack.c.0.s8 %v37
    %v39 = vlaneseq
    %v40 = vshrl.u32 %v39, 7
    %v41 = vsub.s32 %v38, %v40
    %v42 = vrot.slane %v35, %v41
    %v44 = vadd.f32 %v24, %v42
    %45 = vst [vmem:[#allocation5] sm:$0xf] %v44
    // Predicated region
    $region14: #{tpu_custom_call.1} parent=1 // pred_check
      _
    $region15: #{tpu_custom_call.1} parent=1 // pred_check_branch
      %47 = sbr.rel (0) target = $region17
    $region16: #{tpu_custom_call.1} parent=1 // pred_region
      %s49 = ssub.s32 64, 64
      %50 = vsyncadd [#allocation4], %s49
      %s52 = sshll.u32 [#allocation5], 4
      %s53 = int_to_ptr.vmem [resolvable:$true] %s52
      %55 = dma.vmem_to_hbm [thread:$0]  %s53, 64, %s2, [#allocation4]
    $region17: #{tpu_custom_call.1} parent=1 // pred_fallthru
      _
    // Predicated region
    $region18: #{tpu_custom_call.1} parent=1 // pred_check
      _
    $region19: #{tpu_custom_call.1} parent=1 // pred_check_branch
      %57 = sbr.rel (0) target = $region21
    $region20: #{tpu_custom_call.1} parent=1 // pred_region
      %58 = dma.done [#allocation4], 64
    $region21: #{tpu_custom_call.1} parent=1 // pred_fallthru
      _
    %59 = vsyncpa [#allocation3], 1
    %60 = vsyncpa [#allocation4], 1

</llo_original>
